<compile_context>
chip_gen: v5e
topology: v5e:2x2
jax: 0.10.0
libtpu: 0.0.40
codegen_flags: <defaults>
</compile_context>

<pallas_src>
import jax
import jax.numpy as jnp
from jax.experimental import pallas as pl
from jax.experimental.pallas import tpu as pltpu

LANE = 128      # TPU lane width; hidden (inner) feature dims padded to this.
SUBLANE = 8     # batch tile must be a multiple of this.
_DEFAULT_VMEM_LIMIT = 24 * 1024 * 1024  # only override scoped VMEM beyond this


def _round_up(n, m):
    return ((n + m - 1) // m) * m


def _qnet_kernel(x_ref,
                 w1_ref, b1_ref,
                 w2_ref, b2_ref,
                 w3_ref, b3_ref,
                 w4_ref, b4_ref,
                 o_ref):
    cdt = w1_ref.dtype  # MXU operand dtype (bf16 or f32)

    x = x_ref[...].astype(cdt)                                   # (TB, S)

    # Layer 1: Linear + ReLU (accumulate in f32, epilogue in f32)
    h = jnp.dot(x, w1_ref[...], preferred_element_type=jnp.float32) + b1_ref[...]
    h = jnp.maximum(h, 0.0)

    # Layer 2: Linear + ReLU
    h = jnp.dot(h.astype(cdt), w2_ref[...],
                preferred_element_type=jnp.float32) + b2_ref[...]
    h = jnp.maximum(h, 0.0)

    # Layer 3: Linear + ReLU
    h = jnp.dot(h.astype(cdt), w3_ref[...],
                preferred_element_type=jnp.float32) + b3_ref[...]
    h = jnp.maximum(h, 0.0)

    # Layer 4: Linear (no activation); out-dim = action_size (unpadded)
    q = jnp.dot(h.astype(cdt), w4_ref[...],
                preferred_element_type=jnp.float32) + b4_ref[...]

    o_ref[...] = q.astype(o_ref.dtype)


def prepare_qnetwork_params(params, matmul_dtype=jnp.bfloat16):
    """One-time host-side parameter prep (do NOT call per forward step).

    - Pads the hidden (inner) feature dims to multiples of LANE (exact
      through Linear+ReLU).
    - Leaves the first layer's in-dim (state_size) and the last layer's
      out-dim (action_size) unpadded.
    - Casts weights to the MXU operand dtype (bf16 by default for v6e/v7x
      throughput; pass jnp.float32 for exactness).  Biases stay f32.
    """
    state_size = params["w1"].shape[0]
    h1_pad = _round_up(params["w1"].shape[1], LANE)
    h2_pad = _round_up(params["w2"].shape[1], LANE)
    hf_pad = _round_up(params["w3"].shape[1], LANE)
    action_size = params["w4"].shape[1]

    def pad_w(w, in_pad, out_pad):
        fi, fo = w.shape
        return jnp.pad(w, ((0, in_pad - fi), (0, out_pad - fo))).astype(matmul_dtype)

    def pad_b(b, out_pad):
        return jnp.pad(b, ((0, 0), (0, out_pad - b.shape[1]))).astype(jnp.float32)

    return {
        "w1": pad_w(params["w1"], state_size, h1_pad),
        "b1": pad_b(params["b1"], h1_pad),
        "w2": pad_w(params["w2"], h1_pad, h2_pad),
        "b2": pad_b(params["b2"], h2_pad),
        "w3": pad_w(params["w3"], h2_pad, hf_pad),
        "b3": pad_b(params["b3"], hf_pad),
        "w4": pad_w(params["w4"], hf_pad, action_size),
        "b4": pad_b(params["b4"], action_size),
    }


def qnetwork_forward(x, prepared, *, tb_max=1024):
    """Fused QNetwork forward pass.

    x:        (batch, state_size) float32
    prepared: output of prepare_qnetwork_params (padded / cast once).
    returns   (batch, action_size) float32
    """
    batch, state_size = x.shape
    assert prepared["w1"].shape[0] == state_size
    action_size = prepared["w4"].shape[1]

    # --- batch tile: as large as possible (amortize per-step pipeline
    # overhead), but keep >= 2 grid steps so both v7x TensorCores get work.
    half = _round_up(max((batch + 1) // 2, SUBLANE), SUBLANE)
    tb = max(SUBLANE, min(tb_max, half))
    b_pad = _round_up(batch, tb)
    x_in = x if b_pad == batch else jnp.pad(x, ((0, b_pad - batch), (0, 0)))
    grid = (b_pad // tb,)

    def _resident(a):
        # Full-array block + constant index_map -> stays resident in VMEM.
        return pl.BlockSpec(a.shape, lambda i: (0,) * a.ndim)

    in_specs = [
        pl.BlockSpec((tb, state_size), lambda i: (i, 0)),  # x tile per step
        _resident(prepared["w1"]), _resident(prepared["b1"]),
        _resident(prepared["w2"]), _resident(prepared["b2"]),
        _resident(prepared["w3"]), _resident(prepared["b3"]),
        _resident(prepared["w4"]), _resident(prepared["b4"]),
    ]
    out_spec = pl.BlockSpec((tb, action_size), lambda i: (i, 0))

    # Advisory cost estimate so XLA can schedule neighboring ops around us.
    w_shapes = [prepared[f"w{i}"].shape for i in range(1, 5)]
    flops = 2 * b_pad * sum(fi * fo for fi, fo in w_shapes)
    param_bytes = sum(int(v.size) * v.dtype.itemsize for v in prepared.values())
    bytes_accessed = (int(x_in.size) * x_in.dtype.itemsize
                      + param_bytes
                      + b_pad * action_size * 4)

    # VMEM budget guard for the resident-weight strategy (weights are
    # double-buffered by the pipeline).
    h_widest = max(fo for _, fo in w_shapes[:3])
    vmem_est = (2 * param_bytes
                + 2 * tb * state_size * x.dtype.itemsize
                + 2 * tb * action_size * 4
                + 4 * tb * h_widest * 4)
    vmem_limit = None
    if vmem_est > _DEFAULT_VMEM_LIMIT:
        # TODO(synk): if hidden sizes grow enough that resident weights
        # overflow VMEM (v7x: 64 MiB physical), tile the hidden/out dim with
        # an extra grid axis instead of just raising the limit.
        vmem_limit = int(vmem_est * 1.25)

    q = pl.pallas_call(
        _qnet_kernel,
        out_shape=jax.ShapeDtypeStruct((b_pad, action_size), jnp.float32),
        grid=grid,
        in_specs=in_specs,
        out_specs=out_spec,
        compiler_params=pltpu.CompilerParams(
            dimension_semantics=("parallel",),   # batch tiles across TCs (v7x)
            vmem_limit_bytes=vmem_limit),
        cost_estimate=pl.CostEstimate(
            flops=flops, transcendentals=0, bytes_accessed=bytes_accessed),
    )(x_in,
      prepared["w1"], prepared["b1"],
      prepared["w2"], prepared["b2"],
      prepared["w3"], prepared["b3"],
      prepared["w4"], prepared["b4"])

    return q if b_pad == batch else q[:batch]


def init_qnetwork_params(key, state_size, action_size, hidden_size, hidden_size_final):
    """Deterministic synthetic parameters (PyTorch-like uniform fan-in init).

    Weights stored transposed as (in_features, out_features); biases (1, out).
    """
    dims = [
        (state_size, hidden_size),
        (hidden_size, hidden_size),
        (hidden_size, hidden_size_final),
        (hidden_size_final, action_size),
    ]
    params = {}
    for i, (fan_in, fan_out) in enumerate(dims, start=1):
        key, kw, kb = jax.random.split(key, 3)
        bound = 1.0 / (fan_in ** 0.5)
        params[f"w{i}"] = jax.random.uniform(
            kw, (fan_in, fan_out), jnp.float32, -bound, bound)
        params[f"b{i}"] = jax.random.uniform(
            kb, (1, fan_out), jnp.float32, -bound, bound)
    return params


def qnetwork_reference(x, params):
    """Plain-JAX reference implementation for correctness checking."""
    h = jnp.maximum(x @ params["w1"] + params["b1"], 0.0)
    h = jnp.maximum(h @ params["w2"] + params["b2"], 0.0)
    h = jnp.maximum(h @ params["w3"] + params["b3"], 0.0)
    return h @ params["w4"] + params["b4"]


if __name__ == "__main__":
    # Module-consistent small shapes: state (batch x state_size) -> q-values
    # (batch x action_size).  batch=256 with the tile heuristic gives a
    # 2-step "parallel" grid (exercises pipelining / both v7x TCs).
    batch = 256
    state_size = 16
    action_size = 4
    hidden_size = 32
    hidden_size_final = 32

    key = jax.random.PRNGKey(0)
    key, kx = jax.random.split(key)
    x = jax.random.normal(kx, (batch, state_size), jnp.float32)

    params = init_qnetwork_params(
        key, state_size, action_size, hidden_size, hidden_size_final)
    q_ref = qnetwork_reference(x, params)

    # 1) f32 MXU operands: exact vs reference.
    pp_f32 = prepare_qnetwork_params(params, matmul_dtype=jnp.float32)
    q_f32 = jax.block_until_ready(qnetwork_forward(x, pp_f32))
    assert q_f32.shape == (batch, action_size)
    assert jnp.allclose(q_f32, q_ref, atol=1e-5, rtol=1e-5), "f32 mismatch"

    # 2) bf16 MXU operands (default; throughput path on v6e/v7x): looser tol.
    pp_bf16 = prepare_qnetwork_params(params)  # bf16 weights, f32 epilogue
    q_bf16 = jax.block_until_ready(qnetwork_forward(x, pp_bf16))
    assert q_bf16.shape == (batch, action_size)
    assert jnp.allclose(q_bf16, q_ref, atol=5e-2, rtol=5e-2), "bf16 mismatch"

    # TODO(synk): norm=True branch (LayerNorm variants) not exercised; the
    # default constructor path (norm=False) is what this kernel implements.
    print("KERNEL_OK")
</pallas_src>

<mosaic_0001>
module attributes {stable_mosaic.version = 11 : i64} {
  func.func @_qnet_kernel(%arg0: i32, %arg1: memref<128x16xf32, #tpu.memory_space<vmem>>, %arg2: memref<16x128xf32, #tpu.memory_space<vmem>>, %arg3: memref<1x128xf32, #tpu.memory_space<vmem>>, %arg4: memref<128x128xf32, #tpu.memory_space<vmem>>, %arg5: memref<1x128xf32, #tpu.memory_space<vmem>>, %arg6: memref<128x128xf32, #tpu.memory_space<vmem>>, %arg7: memref<1x128xf32, #tpu.memory_space<vmem>>, %arg8: memref<128x4xf32, #tpu.memory_space<vmem>>, %arg9: memref<1x4xf32, #tpu.memory_space<vmem>>, %arg10: memref<128x4xf32, #tpu.memory_space<vmem>>) attributes {dimension_semantics = [#tpu.dimension_semantics<parallel>], iteration_bounds = array<i64: 2>, scalar_prefetch = 0 : i64, scratch_operands = 0 : i64, tpu.core_type = #tpu.core_type<tc>, window_params = [{transform_indices = @transform_0, window_bounds = array<i64: 128, 16>}, {pipeline_mode = #tpu.pipeline_mode<synchronous>, transform_indices = @transform_1, window_bounds = array<i64: 16, 128>}, {pipeline_mode = #tpu.pipeline_mode<synchronous>, transform_indices = @transform_2, window_bounds = array<i64: 1, 128>}, {pipeline_mode = #tpu.pipeline_mode<synchronous>, transform_indices = @transform_3, window_bounds = array<i64: 128, 128>}, {pipeline_mode = #tpu.pipeline_mode<synchronous>, transform_indices = @transform_4, window_bounds = array<i64: 1, 128>}, {pipeline_mode = #tpu.pipeline_mode<synchronous>, transform_indices = @transform_5, window_bounds = array<i64: 128, 128>}, {pipeline_mode = #tpu.pipeline_mode<synchronous>, transform_indices = @transform_6, window_bounds = array<i64: 1, 128>}, {pipeline_mode = #tpu.pipeline_mode<synchronous>, transform_indices = @transform_7, window_bounds = array<i64: 128, 4>}, {pipeline_mode = #tpu.pipeline_mode<synchronous>, transform_indices = @transform_8, window_bounds = array<i64: 1, 4>}, {transform_indices = @transform_9, window_bounds = array<i64: 128, 4>}]} {
    %c0 = arith.constant 0 : index
    %c0_0 = arith.constant 0 : index
    %0 = vector.load %arg1[%c0, %c0_0] : memref<128x16xf32, #tpu.memory_space<vmem>>, vector<128x16xf32>
    %c0_1 = arith.constant 0 : index
    %c0_2 = arith.constant 0 : index
    %1 = vector.load %arg2[%c0_1, %c0_2] : memref<16x128xf32, #tpu.memory_space<vmem>>, vector<16x128xf32>
    %cst = arith.constant dense<0.000000e+00> : vector<128x128xf32>
    %2 = tpu.matmul %0, %1, %cst {dimension_numbers = #tpu.dot_dimension_numbers<[1], [0], [0], [1], [0, 0, 1, 1], [], []>} : vector<128x16xf32>, vector<16x128xf32>, vector<128x128xf32> -> vector<128x128xf32>
    %c0_3 = arith.constant 0 : index
    %c0_4 = arith.constant 0 : index
    %3 = vector.load %arg3[%c0_3, %c0_4] : memref<1x128xf32, #tpu.memory_space<vmem>>, vector<1x128xf32>
    %4 = vector.broadcast %3 : vector<1x128xf32> to vector<128x128xf32>
    %5 = arith.addf %2, %4 : vector<128x128xf32>
    %cst_5 = arith.constant 0.000000e+00 : f32
    %6 = vector.broadcast %cst_5 : f32 to vector<128x128xf32>
    %7 = arith.maximumf %5, %6 : vector<128x128xf32>
    %c0_6 = arith.constant 0 : index
    %c0_7 = arith.constant 0 : index
    %8 = vector.load %arg4[%c0_6, %c0_7] : memref<128x128xf32, #tpu.memory_space<vmem>>, vector<128x128xf32>
    %cst_8 = arith.constant dense<0.000000e+00> : vector<128x128xf32>
    %9 = tpu.matmul %7, %8, %cst_8 {dimension_numbers = #tpu.dot_dimension_numbers<[1], [0], [0], [1], [0, 0, 1, 1], [], []>} : vector<128x128xf32>, vector<128x128xf32>, vector<128x128xf32> -> vector<128x128xf32>
    %c0_9 = arith.constant 0 : index
    %c0_10 = arith.constant 0 : index
    %10 = vector.load %arg5[%c0_9, %c0_10] : memref<1x128xf32, #tpu.memory_space<vmem>>, vector<1x128xf32>
    %11 = vector.broadcast %10 : vector<1x128xf32> to vector<128x128xf32>
    %12 = arith.addf %9, %11 : vector<128x128xf32>
    %cst_11 = arith.constant 0.000000e+00 : f32
    %13 = vector.broadcast %cst_11 : f32 to vector<128x128xf32>
    %14 = arith.maximumf %12, %13 : vector<128x128xf32>
    %c0_12 = arith.constant 0 : index
    %c0_13 = arith.constant 0 : index
    %15 = vector.load %arg6[%c0_12, %c0_13] : memref<128x128xf32, #tpu.memory_space<vmem>>, vector<128x128xf32>
    %cst_14 = arith.constant dense<0.000000e+00> : vector<128x128xf32>
    %16 = tpu.matmul %14, %15, %cst_14 {dimension_numbers = #tpu.dot_dimension_numbers<[1], [0], [0], [1], [0, 0, 1, 1], [], []>} : vector<128x128xf32>, vector<128x128xf32>, vector<128x128xf32> -> vector<128x128xf32>
    %c0_15 = arith.constant 0 : index
    %c0_16 = arith.constant 0 : index
    %17 = vector.load %arg7[%c0_15, %c0_16] : memref<1x128xf32, #tpu.memory_space<vmem>>, vector<1x128xf32>
    %18 = vector.broadcast %17 : vector<1x128xf32> to vector<128x128xf32>
    %19 = arith.addf %16, %18 : vector<128x128xf32>
    %cst_17 = arith.constant 0.000000e+00 : f32
    %20 = vector.broadcast %cst_17 : f32 to vector<128x128xf32>
    %21 = arith.maximumf %19, %20 : vector<128x128xf32>
    %c0_18 = arith.constant 0 : index
    %c0_19 = arith.constant 0 : index
    %22 = vector.load %arg8[%c0_18, %c0_19] : memref<128x4xf32, #tpu.memory_space<vmem>>, vector<128x4xf32>
    %cst_20 = arith.constant dense<0.000000e+00> : vector<128x4xf32>
    %23 = tpu.matmul %21, %22, %cst_20 {dimension_numbers = #tpu.dot_dimension_numbers<[1], [0], [0], [1], [0, 0, 1, 1], [], []>} : vector<128x128xf32>, vector<128x4xf32>, vector<128x4xf32> -> vector<128x4xf32>
    %c0_21 = arith.constant 0 : index
    %c0_22 = arith.constant 0 : index
    %24 = vector.load %arg9[%c0_21, %c0_22] : memref<1x4xf32, #tpu.memory_space<vmem>>, vector<1x4xf32>
    %25 = vector.broadcast %24 : vector<1x4xf32> to vector<128x4xf32>
    %26 = arith.addf %23, %25 : vector<128x4xf32>
    %c0_23 = arith.constant 0 : index
    %c0_24 = arith.constant 0 : index
    %27 = vector.load %arg10[%c0_23, %c0_24] : memref<128x4xf32, #tpu.memory_space<vmem>>, vector<128x4xf32>
    tpu.vector_store %arg10[%c0_23, %c0_24], %26 {strides = array<i32>} : memref<128x4xf32, #tpu.memory_space<vmem>>, vector<128x4xf32>,
    return
  }
  func.func @transform_0(%arg0: i32) -> (i32, i32) {
    %c0_i32 = arith.constant 0 : i32
    %c0_i32_0 = arith.constant 0 : i32
    return %arg0, %c0_i32 : i32, i32
  }
  func.func @transform_1(%arg0: i32) -> (i32, i32) {
    %c0_i32 = arith.constant 0 : i32
    %c0_i32_0 = arith.constant 0 : i32
    %c0_i32_1 = arith.constant 0 : i32
    return %c0_i32, %c0_i32_0 : i32, i32
  }
  func.func @transform_2(%arg0: i32) -> (i32, i32) {
    %c0_i32 = arith.constant 0 : i32
    %c0_i32_0 = arith.constant 0 : i32
    %c0_i32_1 = arith.constant 0 : i32
    return %c0_i32, %c0_i32_0 : i32, i32
  }
  func.func @transform_3(%arg0: i32) -> (i32, i32) {
    %c0_i32 = arith.constant 0 : i32
    %c0_i32_0 = arith.constant 0 : i32
    %c0_i32_1 = arith.constant 0 : i32
    return %c0_i32, %c0_i32_0 : i32, i32
  }
  func.func @transform_4(%arg0: i32) -> (i32, i32) {
    %c0_i32 = arith.constant 0 : i32
    %c0_i32_0 = arith.constant 0 : i32
    %c0_i32_1 = arith.constant 0 : i32
    return %c0_i32, %c0_i32_0 : i32, i32
  }
  func.func @transform_5(%arg0: i32) -> (i32, i32) {
    %c0_i32 = arith.constant 0 : i32
    %c0_i32_0 = arith.constant 0 : i32
    %c0_i32_1 = arith.constant 0 : i32
    return %c0_i32, %c0_i32_0 : i32, i32
  }
  func.func @transform_6(%arg0: i32) -> (i32, i32) {
    %c0_i32 = arith.constant 0 : i32
    %c0_i32_0 = arith.constant 0 : i32
    %c0_i32_1 = arith.constant 0 : i32
    return %c0_i32, %c0_i32_0 : i32, i32
  }
  func.func @transform_7(%arg0: i32) -> (i32, i32) {
    %c0_i32 = arith.constant 0 : i32
    %c0_i32_0 = arith.constant 0 : i32
    %c0_i32_1 = arith.constant 0 : i32
    return %c0_i32, %c0_i32_0 : i32, i32
  }
  func.func @transform_8(%arg0: i32) -> (i32, i32) {
    %c0_i32 = arith.constant 0 : i32
    %c0_i32_0 = arith.constant 0 : i32
    %c0_i32_1 = arith.constant 0 : i32
    return %c0_i32, %c0_i32_0 : i32, i32
  }
  func.func @transform_9(%arg0: i32) -> (i32, i32) {
    %c0_i32 = arith.constant 0 : i32
    %c0_i32_0 = arith.constant 0 : i32
    return %arg0, %c0_i32 : i32, i32
  }
}

</mosaic_0001>

<llo_original>
// kernel: tpu_custom_call.1
$region0: #{tpu_custom_call.1}
  #allocation0 [shape = 'u32[]', space=smem, size = 0x4, offset = 0x4, fixed_abs, tag = 'smem constant byte address 0x4 - core index']
  #allocation1 [shape = 'u32[72,128]{1,0:T(1,128)}', space=vmem, size = 0x9000, scoped, tag = 'internal scratch']
  %s0 = inlined_call_operand.vmem [shape: f32[256,16], index: 0, kind: input, shape index: {}]
  %s1 = inlined_call_operand.vmem [shape: f32[16,128], index: 1, kind: input, shape index: {}]
  %s2 = inlined_call_operand.vmem [shape: f32[1,128], index: 2, kind: input, shape index: {}]
  %s3 = inlined_call_operand.vmem [shape: f32[128,128], index: 3, kind: input, shape index: {}]
  %s4 = inlined_call_operand.vmem [shape: f32[1,128], index: 4, kind: input, shape index: {}]
  %s5 = inlined_call_operand.vmem [shape: f32[128,128], index: 5, kind: input, shape index: {}]
  %s6 = inlined_call_operand.vmem [shape: f32[1,128], index: 6, kind: input, shape index: {}]
  %s7 = inlined_call_operand.vmem [shape: f32[128,4], index: 7, kind: input, shape index: {}]
  %s8 = inlined_call_operand.vmem [shape: f32[1,4], index: 8, kind: input, shape index: {}]
  %s9 = inlined_call_operand.vmem [shape: f32[256,4], index: 9, kind: output, shape index: {}]
  %s10 = sld [smem:[#allocation0]]
  $region69: #{tpu_custom_call.1} parent=0
    _
  %s12 = ssub.s32 1, %s10
  %s13 = scalar_select 0, %s12, %s10
  loop: start=0, step=1, limit=4
  $region2: #{tpu_custom_call.1} parent=0 // loop_pre_header
    _
  $region3: #{tpu_custom_call.1} parent=0 // loop_header
    %s15 = sphi 0, %s19
    %p16 = scmp.ge.s32.totalorder %s15, 4
    %s25 = sphi 0, %s27
    %s28 = sphi 0, %s25
    %s29 = sphi 0, %s28
    %s45 = sphi 0, %s29
    %s49 = sphi 0, %s49
    %s51 = sphi 0, %s49
    %s52 = sphi 0, %s51
    %s66 = sphi 0, %s52
    %s70 = sphi 0, %s70
    %s72 = sphi 0, %s70
    %s73 = sphi 0, %s72
    %s87 = sphi 0, %s73
    %s91 = sphi 0, %s91
    %s93 = sphi 0, %s91
    %s94 = sphi 0, %s93
    %s108 = sphi 0, %s94
    %s112 = sphi 0, %s112
    %s114 = sphi 0, %s112
    %s115 = sphi 0, %s114
    %s129 = sphi 0, %s115
    %s133 = sphi 0, %s133
    %s135 = sphi 0, %s133
    %s136 = sphi 0, %s135
    %s150 = sphi 0, %s136
    %s154 = sphi 0, %s154
    %s156 = sphi 0, %s154
    %s157 = sphi 0, %s156
    %s171 = sphi 0, %s157
    %s175 = sphi 0, %s175
    %s177 = sphi 0, %s175
    %s178 = sphi 0, %s177
    %s192 = sphi 0, %s178
    %s196 = sphi 0, %s196
    %s198 = sphi 0, %s196
    %s199 = sphi 0, %s198
    %s213 = sphi 0, %s199
    %s219 = sphi 0, %s221
    %s222 = sphi 0, %s219
    %s223 = sphi 0, %s222
    %s239 = sphi 0, %s223
  $region4: #{tpu_custom_call.1} parent=0 // loop_header_branch
    %18 = sbr.rel (%p16) target = $region8
  $region5: #{tpu_custom_call.1} parent=0 // loop_body
    %s20 = ssub.s32 %s15, 1
    %s21 = ssub.s32 %s15, 2
    %s22 = sadd.s32 %s15, 1
    %s23 = ssub.s32 %s15, %s22
    %p24 = scmp.eq.s32.totalorder %s23, 0
    %s26 = sadd.s32 %s25, 1
    %s27 = scalar_select %p24, %s25, %s26
    %p30 = pneg %p24
    %p31 = scmp.eq.s32.totalorder %s15, 1
    %p32 = por %p30, %p31
    %p33 = scmp.ne.s32.totalorder %s25, %s28
    %p34 = scmp.eq.s32.totalorder %s15, 0
    %p35 = por %p33, %p34
    %p36 = scmp.ne.s32.totalorder %s25, %s28
    %p37 = scmp.eq.s32.totalorder %s20, 1
    %p38 = por %p36, %p37
    %p39 = scmp.ne.s32.totalorder %s28, %s29
    %p40 = scmp.eq.s32.totalorder %s20, 0
    %p41 = por %p39, %p40
    %p42 = scmp.ne.s32.totalorder %s28, %s29
    %p43 = scmp.eq.s32.totalorder %s21, 1
    %p44 = por %p42, %p43
    %p46 = scmp.ne.s32.totalorder %s29, %s45
    %p47 = scmp.eq.s32.totalorder %s21, 0
    %p48 = por %p46, %p47
    %s50 = sadd.s32 %s49, 1
    %p53 = scmp.eq.s32.totalorder %s15, 1
    %p54 = scmp.ne.s32.totalorder %s49, %s51
    %p55 = scmp.eq.s32.totalorder %s15, 0
    %p56 = por %p54, %p55
    %p57 = scmp.ne.s32.totalorder %s49, %s51
    %p58 = scmp.eq.s32.totalorder %s20, 1
    %p59 = por %p57, %p58
    %p60 = scmp.ne.s32.totalorder %s51, %s52
    %p61 = scmp.eq.s32.totalorder %s20, 0
    %p62 = por %p60, %p61
    %p63 = scmp.ne.s32.totalorder %s51, %s52
    %p64 = scmp.eq.s32.totalorder %s21, 1
    %p65 = por %p63, %p64
    %p67 = scmp.ne.s32.totalorder %s52, %s66
    %p68 = scmp.eq.s32.totalorder %s21, 0
    %p69 = por %p67, %p68
    %s71 = sadd.s32 %s70, 1
    %p74 = scmp.eq.s32.totalorder %s15, 1
    %p75 = scmp.ne.s32.totalorder %s70, %s72
    %p76 = scmp.eq.s32.totalorder %s15, 0
    %p77 = por %p75, %p76
    %p78 = scmp.ne.s32.totalorder %s70, %s72
    %p79 = scmp.eq.s32.totalorder %s20, 1
    %p80 = por %p78, %p79
    %p81 = scmp.ne.s32.totalorder %s72, %s73
    %p82 = scmp.eq.s32.totalorder %s20, 0
    %p83 = por %p81, %p82
    %p84 = scmp.ne.s32.totalorder %s72, %s73
    %p85 = scmp.eq.s32.totalorder %s21, 1
    %p86 = por %p84, %p85
    %p88 = scmp.ne.s32.totalorder %s73, %s87
    %p89 = scmp.eq.s32.totalorder %s21, 0
    %p90 = por %p88, %p89
    %s92 = sadd.s32 %s91, 1
    %p95 = scmp.eq.s32.totalorder %s15, 1
    %p96 = scmp.ne.s32.totalorder %s91, %s93
    %p97 = scmp.eq.s32.totalorder %s15, 0
    %p98 = por %p96, %p97
    %p99 = scmp.ne.s32.totalorder %s91, %s93
    %p100 = scmp.eq.s32.totalorder %s20, 1
    %p101 = por %p99, %p100
    %p102 = scmp.ne.s32.totalorder %s93, %s94
    %p103 = scmp.eq.s32.totalorder %s20, 0
    %p104 = por %p102, %p103
    %p105 = scmp.ne.s32.totalorder %s93, %s94
    %p106 = scmp.eq.s32.totalorder %s21, 1
    %p107 = por %p105, %p106
    %p109 = scmp.ne.s32.totalorder %s94, %s108
    %p110 = scmp.eq.s32.totalorder %s21, 0
    %p111 = por %p109, %p110
    %s113 = sadd.s32 %s112, 1
    %p116 = scmp.eq.s32.totalorder %s15, 1
    %p117 = scmp.ne.s32.totalorder %s112, %s114
    %p118 = scmp.eq.s32.totalorder %s15, 0
    %p119 = por %p117, %p118
    %p120 = scmp.ne.s32.totalorder %s112, %s114
    %p121 = scmp.eq.s32.totalorder %s20, 1
    %p122 = por %p120, %p121
    %p123 = scmp.ne.s32.totalorder %s114, %s115
    %p124 = scmp.eq.s32.totalorder %s20, 0
    %p125 = por %p123, %p124
    %p126 = scmp.ne.s32.totalorder %s114, %s115
    %p127 = scmp.eq.s32.totalorder %s21, 1
    %p128 = por %p126, %p127
    %p130 = scmp.ne.s32.totalorder %s115, %s129
    %p131 = scmp.eq.s32.totalorder %s21, 0
    %p132 = por %p130, %p131
    %s134 = sadd.s32 %s133, 1
    %p137 = scmp.eq.s32.totalorder %s15, 1
    %p138 = scmp.ne.s32.totalorder %s133, %s135
    %p139 = scmp.eq.s32.totalorder %s15, 0
    %p140 = por %p138, %p139
    %p141 = scmp.ne.s32.totalorder %s133, %s135
    %p142 = scmp.eq.s32.totalorder %s20, 1
    %p143 = por %p141, %p142
    %p144 = scmp.ne.s32.totalorder %s135, %s136
    %p145 = scmp.eq.s32.totalorder %s20, 0
    %p146 = por %p144, %p145
    %p147 = scmp.ne.s32.totalorder %s135, %s136
    %p148 = scmp.eq.s32.totalorder %s21, 1
    %p149 = por %p147, %p148
    %p151 = scmp.ne.s32.totalorder %s136, %s150
    %p152 = scmp.eq.s32.totalorder %s21, 0
    %p153 = por %p151, %p152
    %s155 = sadd.s32 %s154, 1
    %p158 = scmp.eq.s32.totalorder %s15, 1
    %p159 = scmp.ne.s32.totalorder %s154, %s156
    %p160 = scmp.eq.s32.totalorder %s15, 0
    %p161 = por %p159, %p160
    %p162 = scmp.ne.s32.totalorder %s154, %s156
    %p163 = scmp.eq.s32.totalorder %s20, 1
    %p164 = por %p162, %p163
    %p165 = scmp.ne.s32.totalorder %s156, %s157
    %p166 = scmp.eq.s32.totalorder %s20, 0
    %p167 = por %p165, %p166
    %p168 = scmp.ne.s32.totalorder %s156, %s157
    %p169 = scmp.eq.s32.totalorder %s21, 1
    %p170 = por %p168, %p169
    %p172 = scmp.ne.s32.totalorder %s157, %s171
    %p173 = scmp.eq.s32.totalorder %s21, 0
    %p174 = por %p172, %p173
    %s176 = sadd.s32 %s175, 1
    %p179 = scmp.eq.s32.totalorder %s15, 1
    %p180 = scmp.ne.s32.totalorder %s175, %s177
    %p181 = scmp.eq.s32.totalorder %s15, 0
    %p182 = por %p180, %p181
    %p183 = scmp.ne.s32.totalorder %s175, %s177
    %p184 = scmp.eq.s32.totalorder %s20, 1
    %p185 = por %p183, %p184
    %p186 = scmp.ne.s32.totalorder %s177, %s178
    %p187 = scmp.eq.s32.totalorder %s20, 0
    %p188 = por %p186, %p187
    %p189 = scmp.ne.s32.totalorder %s177, %s178
    %p190 = scmp.eq.s32.totalorder %s21, 1
    %p191 = por %p189, %p190
    %p193 = scmp.ne.s32.totalorder %s178, %s192
    %p194 = scmp.eq.s32.totalorder %s21, 0
    %p195 = por %p193, %p194
    %s197 = sadd.s32 %s196, 1
    %p200 = scmp.eq.s32.totalorder %s15, 1
    %p201 = scmp.ne.s32.totalorder %s196, %s198
    %p202 = scmp.eq.s32.totalorder %s15, 0
    %p203 = por %p201, %p202
    %p204 = scmp.ne.s32.totalorder %s196, %s198
    %p205 = scmp.eq.s32.totalorder %s20, 1
    %p206 = por %p204, %p205
    %p207 = scmp.ne.s32.totalorder %s198, %s199
    %p208 = scmp.eq.s32.totalorder %s20, 0
    %p209 = por %p207, %p208
    %p210 = scmp.ne.s32.totalorder %s198, %s199
    %p211 = scmp.eq.s32.totalorder %s21, 1
    %p212 = por %p210, %p211
    %p214 = scmp.ne.s32.totalorder %s199, %s213
    %p215 = scmp.eq.s32.totalorder %s21, 0
    %p216 = por %p214, %p215
    %s217 = ssub.s32 %s15, %s22
    %p218 = scmp.eq.s32.totalorder %s217, 0
    %s220 = sadd.s32 %s219, 1
    %s221 = scalar_select %p218, %s219, %s220
    %p224 = pneg %p218
    %p225 = scmp.eq.s32.totalorder %s15, 1
    %p226 = por %p224, %p225
    %p227 = scmp.ne.s32.totalorder %s219, %s222
    %p228 = scmp.eq.s32.totalorder %s15, 0
    %p229 = por %p227, %p228
    %p230 = scmp.ne.s32.totalorder %s219, %s222
    %p231 = scmp.eq.s32.totalorder %s20, 1
    %p232 = por %p230, %p231
    %p233 = scmp.ne.s32.totalorder %s222, %s223
    %p234 = scmp.eq.s32.totalorder %s20, 0
    %p235 = por %p233, %p234
    %p236 = scmp.ne.s32.totalorder %s222, %s223
    %p237 = scmp.eq.s32.totalorder %s21, 1
    %p238 = por %p236, %p237
    %p240 = scmp.ne.s32.totalorder %s223, %s239
    %p241 = scmp.eq.s32.totalorder %s21, 0
    %p242 = por %p240, %p241
    %p243 = scmp.le.s32.totalorder 1, %s15
    %p244 = scmp.lt.s32.totalorder %s15, 3
    %p245 = pnand %p243, %p244
    %p246 = pneg %p245
    // Predicated region
    $region9: #{tpu_custom_call.1} parent=5 // pred_check
      _
    $region10: #{tpu_custom_call.1} parent=5 // pred_check_branch
      %248 = sbr.rel (%p245) target = $region12
    $region11: #{tpu_custom_call.1} parent=5 // pred_region
      %s249 = ssub.s32 %s15, 1
      // Predicated region
      $region13: #{tpu_custom_call.1} parent=11 // pred_check
        %p250 = pneg %p62
      $region14: #{tpu_custom_call.1} parent=11 // pred_check_branch
        %252 = sbr.rel (%p250) target = $region16
      $region15: #{tpu_custom_call.1} parent=11 // pred_region
        _
      $region16: #{tpu_custom_call.1} parent=11 // pred_fallthru
        _
      // Predicated region
      $region17: #{tpu_custom_call.1} parent=11 // pred_check
        %p253 = pneg %p83
      $region18: #{tpu_custom_call.1} parent=11 // pred_check_branch
        %255 = sbr.rel (%p253) target = $region20
      $region19: #{tpu_custom_call.1} parent=11 // pred_region
        _
      $region20: #{tpu_custom_call.1} parent=11 // pred_fallthru
        _
      // Predicated region
      $region21: #{tpu_custom_call.1} parent=11 // pred_check
        %p256 = pneg %p104
      $region22: #{tpu_custom_call.1} parent=11 // pred_check_branch
        %258 = sbr.rel (%p256) target = $region24
      $region23: #{tpu_custom_call.1} parent=11 // pred_region
        _
      $region24: #{tpu_custom_call.1} parent=11 // pred_fallthru
        _
      // Predicated region
      $region25: #{tpu_custom_call.1} parent=11 // pred_check
        %p259 = pneg %p125
      $region26: #{tpu_custom_call.1} parent=11 // pred_check_branch
        %261 = sbr.rel (%p259) target = $region28
      $region27: #{tpu_custom_call.1} parent=11 // pred_region
        _
      $region28: #{tpu_custom_call.1} parent=11 // pred_fallthru
        _
      // Predicated region
      $region29: #{tpu_custom_call.1} parent=11 // pred_check
        %p262 = pneg %p146
      $region30: #{tpu_custom_call.1} parent=11 // pred_check_branch
        %264 = sbr.rel (%p262) target = $region32
      $region31: #{tpu_custom_call.1} parent=11 // pred_region
        _
      $region32: #{tpu_custom_call.1} parent=11 // pred_fallthru
        _
      // Predicated region
      $region33: #{tpu_custom_call.1} parent=11 // pred_check
        %p265 = pneg %p167
      $region34: #{tpu_custom_call.1} parent=11 // pred_check_branch
        %267 = sbr.rel (%p265) target = $region36
      $region35: #{tpu_custom_call.1} parent=11 // pred_region
        _
      $region36: #{tpu_custom_call.1} parent=11 // pred_fallthru
        _
      // Predicated region
      $region37: #{tpu_custom_call.1} parent=11 // pred_check
        %p268 = pneg %p188
      $region38: #{tpu_custom_call.1} parent=11 // pred_check_branch
        %270 = sbr.rel (%p268) target = $region40
      $region39: #{tpu_custom_call.1} parent=11 // pred_region
        _
      $region40: #{tpu_custom_call.1} parent=11 // pred_fallthru
        _
      // Predicated region
      $region41: #{tpu_custom_call.1} parent=11 // pred_check
        %p271 = pneg %p209
      $region42: #{tpu_custom_call.1} parent=11 // pred_check_branch
        %273 = sbr.rel (%p271) target = $region44
      $region43: #{tpu_custom_call.1} parent=11 // pred_region
        _
      $region44: #{tpu_custom_call.1} parent=11 // pred_fallthru
        _
    $region12: #{tpu_custom_call.1} parent=5 // pred_fallthru
      _
    %p274 = scmp.lt.s32.totalorder %s15, 2
    // Predicated region
    $region45: #{tpu_custom_call.1} parent=5 // pred_check
      %p275 = pneg %p274
    $region46: #{tpu_custom_call.1} parent=5 // pred_check_branch
      %277 = sbr.rel (%p275) target = $region48
    $region47: #{tpu_custom_call.1} parent=5 // pred_region
      // Predicated region
      $region49: #{tpu_custom_call.1} parent=47 // pred_check
        %p278 = pneg %p35
      $region50: #{tpu_custom_call.1} parent=47 // pred_check_branch
        %280 = sbr.rel (%p278) target = $region52
      $region51: #{tpu_custom_call.1} parent=47 // pred_region
        %s281 = smul.u32 16, %s15
        %p282 = scmp.lt.s32.totalorder %s281, 31
        %s283 = scalar_select %p282, %s281, 31
        %s284 = smul.addr %s283, 8
        %s285 = scalar_lea.vmem %s0, %s284
        %s286 = smul.u32 16, %s15
      $region52: #{tpu_custom_call.1} parent=47 // pred_fallthru
        _
    $region48: #{tpu_custom_call.1} parent=5 // pred_fallthru
      _
    %p287 = scmp.le.s32.totalorder 1, %s15
    %p288 = scmp.lt.s32.totalorder %s15, 3
    %p289 = pnand %p287, %p288
    %p290 = pneg %p289
    // Predicated region
    $region53: #{tpu_custom_call.1} parent=5 // pred_check
      _
    $region54: #{tpu_custom_call.1} parent=5 // pred_check_branch
      %292 = sbr.rel (%p289) target = $region56
    $region55: #{tpu_custom_call.1} parent=5 // pred_region
      %s293 = ssub.s32 %s15, 1
      %s294 = smul.u32 16, %s20
      %p295 = scmp.lt.s32.totalorder %s294, 31
      %s296 = scalar_select %p295, %s294, 31
      %s297 = smul.addr %s296, 8
      %s298 = scalar_lea.vmem %s0, %s297
      %p299 = pneg %p41
      %p300 = pneg %p38
      %p301 = pneg %p62
      %p302 = pneg %p59
      %p303 = pneg %p83
      %p304 = pneg %p80
      %p305 = pneg %p104
      %p306 = pneg %p101
      %p307 = pneg %p125
      %p308 = pneg %p122
      %p309 = pneg %p146
      %p310 = pneg %p143
      %p311 = pneg %p167
      %p312 = pneg %p164
      %p313 = pneg %p188
      %p314 = pneg %p185
      %p315 = pneg %p209
      %p316 = pneg %p206
      %p317 = pneg %p235
      %p318 = pneg %p232
      %s319 = smul.u32 16, %s20
      %p320 = scmp.lt.s32.totalorder %s319, 31
      %s321 = scalar_select %p320, %s319, 31
      %s322 = smul.addr %s321, 8
      %s323 = scalar_lea.vmem %s9, %s322
      %s324 = smul.u32 16, %s20
      %p325 = scmp.lt.s32.totalorder %s324, 31
      %s326 = scalar_select %p325, %s324, 31
      %s327 = smul.addr %s326, 8
      %s328 = scalar_lea.vmem %s0, %s327
      %s329 = smul.u32 16, %s20
      %s330 = smul.u32 16, %s20
      %p331 = scmp.lt.s32.totalorder %s330, 31
      %s332 = scalar_select %p331, %s330, 31
      %s333 = smul.addr %s332, 8
      %s334 = scalar_lea.vmem %s9, %s333
      %s335 = smul.u32 16, %s20
      %v336 = vld [vmem:[%s328] sm:$0xff]
      %v337 = vld [vmem:[%s328 + $0x8] sm:$0xff]
      %v338 = vld [vmem:[%s328 + $0x10] sm:$0xff]
      %v339 = vld [vmem:[%s328 + $0x18] sm:$0xff]
      %v340 = vld [vmem:[%s328 + $0x20] sm:$0xff]
      %v341 = vld [vmem:[%s328 + $0x28] sm:$0xff]
      %v342 = vld [vmem:[%s328 + $0x30] sm:$0xff]
      %v343 = vld [vmem:[%s328 + $0x38] sm:$0xff]
      %v344 = vld [vmem:[%s328 + $0x40] sm:$0xff]
      %v345 = vld [vmem:[%s328 + $0x48] sm:$0xff]
      %v346 = vld [vmem:[%s328 + $0x50] sm:$0xff]
      %v347 = vld [vmem:[%s328 + $0x58] sm:$0xff]
      %v348 = vld [vmem:[%s328 + $0x60] sm:$0xff]
      %v349 = vld [vmem:[%s328 + $0x68] sm:$0xff]
      %v350 = vld [vmem:[%s328 + $0x70] sm:$0xff]
      %v351 = vld [vmem:[%s328 + $0x78] sm:$0xff]
      %v352 = vld [vmem:[%s1] sm:$0xff]
      %v353 = vld [vmem:[%s1 + $0x8] sm:$0xff]
      %v354 = vld [vmem:[%s2] sm:$0x1]
      %v356 = vperm.slane %v354, 0
      %vm358 = vcmask 130048
      %v360 = vsel %vm358, %v336, 0
      %v363 = vsel %vm358, %v337, 0
      %v366 = vsel %vm358, %v338, 0
      %v369 = vsel %vm358, %v339, 0
      %v372 = vsel %vm358, %v340, 0
      %v375 = vsel %vm358, %v341, 0
      %v378 = vsel %vm358, %v342, 0
      %v381 = vsel %vm358, %v343, 0
      %v384 = vsel %vm358, %v344, 0
      %v387 = vsel %vm358, %v345, 0
      %v390 = vsel %vm358, %v346, 0
      %v393 = vsel %vm358, %v347, 0
      %v396 = vsel %vm358, %v348, 0
      %v399 = vsel %vm358, %v349, 0
      %v402 = vsel %vm358, %v350, 0
      %v405 = vsel %vm358, %v351, 0
      %407 = vmatpush.msra.mxu0 0.0
      %408 = vmatpush.msra.mxu0 0.0
      %409 = vmatpush.msra.mxu0 0.0
      %410 = vmatpush.msra.mxu0 0.0
      %411 = vmatpush.msra.mxu0 0.0
      %412 = vmatpush.msra.mxu0 0.0
      %413 = vmatpush.msra.mxu0 0.0
      %414 = vmatpush.msra.mxu0 0.0
      %415 = vmatpush.msra.mxu0 0.0
      %416 = vmatpush.msra.mxu0 0.0
      %417 = vmatpush.msra.mxu0 0.0
      %418 = vmatpush.msra.mxu0 0.0
      %419 = vmatpush.msra.mxu0 0.0
      %420 = vmatpush.msra.mxu0 0.0
      %421 = vmatpush.msra.mxu0 %v353
      %422 = vmatpush.msra.mxu0 %v352
      %423 = vmatmul.f32.gmra.mxu0 %v360
      %v424 = vpop.f32.mrf.mxu0
      %v425 = vadd.f32 %v356, %v424
      %426 = vmatmul.f32.gmra.mxu0 %v363
      %v427 = vpop.f32.mrf.mxu0
      %v428 = vadd.f32 %v356, %v427
      %429 = vmatmul.f32.gmra.mxu0 %v366
      %v430 = vpop.f32.mrf.mxu0
      %v431 = vadd.f32 %v356, %v430
      %432 = vmatmul.f32.gmra.mxu0 %v369
      %v433 = vpop.f32.mrf.mxu0
      %v434 = vadd.f32 %v356, %v433
      %435 = vmatmul.f32.gmra.mxu0 %v372
      %v436 = vpop.f32.mrf.mxu0
      %v437 = vadd.f32 %v356, %v436
      %438 = vmatmul.f32.gmra.mxu0 %v375
      %v439 = vpop.f32.mrf.mxu0
      %v440 = vadd.f32 %v356, %v439
      %441 = vmatmul.f32.gmra.mxu0 %v378
      %v442 = vpop.f32.mrf.mxu0
      %v443 = vadd.f32 %v356, %v442
      %444 = vmatmul.f32.gmra.mxu0 %v381
      %v445 = vpop.f32.mrf.mxu0
      %v446 = vadd.f32 %v356, %v445
      %447 = vmatmul.f32.gmra.mxu0 %v384
      %v448 = vpop.f32.mrf.mxu0
      %v449 = vadd.f32 %v356, %v448
      %450 = vmatmul.f32.gmra.mxu0 %v387
      %v451 = vpop.f32.mrf.mxu0
      %v452 = vadd.f32 %v356, %v451
      %453 = vmatmul.f32.gmra.mxu0 %v390
      %v454 = vpop.f32.mrf.mxu0
      %v455 = vadd.f32 %v356, %v454
      %456 = vmatmul.f32.gmra.mxu0 %v393
      %v457 = vpop.f32.mrf.mxu0
      %v458 = vadd.f32 %v356, %v457
      %459 = vmatmul.f32.gmra.mxu0 %v396
      %v460 = vpop.f32.mrf.mxu0
      %v461 = vadd.f32 %v356, %v460
      %462 = vmatmul.f32.gmra.mxu0 %v399
      %v463 = vpop.f32.mrf.mxu0
      %v464 = vadd.f32 %v356, %v463
      %465 = vmatmul.f32.gmra.mxu0 %v402
      %v466 = vpop.f32.mrf.mxu0
      %v467 = vadd.f32 %v356, %v466
      %468 = vmatmul.f32.gmra.mxu0 %v405
      %v469 = vpop.f32.mrf.mxu0
      %v470 = vadd.f32 %v356, %v469
      %471 = vdwg.mxu0
      %v472 = vmax.f32 %v425, 0.0
      %v473 = vmax.f32 %v428, 0.0
      %v474 = vmax.f32 %v431, 0.0
      %v475 = vmax.f32 %v434, 0.0
      %v476 = vmax.f32 %v437, 0.0
      %v477 = vmax.f32 %v440, 0.0
      %v478 = vmax.f32 %v443, 0.0
      %v479 = vmax.f32 %v446, 0.0
      %v480 = vmax.f32 %v449, 0.0
      %v481 = vmax.f32 %v452, 0.0
      %v482 = vmax.f32 %v455, 0.0
      %v483 = vmax.f32 %v458, 0.0
      %v484 = vmax.f32 %v461, 0.0
      %v485 = vmax.f32 %v464, 0.0
      %v486 = vmax.f32 %v467, 0.0
      %v487 = vmax.f32 %v470, 0.0
      %v488 = vld [vmem:[%s3] sm:$0xff]
      %v489 = vld [vmem:[%s3 + $0x8] sm:$0xff]
      %v490 = vld [vmem:[%s3 + $0x10] sm:$0xff]
      %v491 = vld [vmem:[%s3 + $0x18] sm:$0xff]
      %v492 = vld [vmem:[%s3 + $0x20] sm:$0xff]
      %v493 = vld [vmem:[%s3 + $0x28] sm:$0xff]
      %v494 = vld [vmem:[%s3 + $0x30] sm:$0xff]
      %v495 = vld [vmem:[%s3 + $0x38] sm:$0xff]
      %v496 = vld [vmem:[%s3 + $0x40] sm:$0xff]
      %v497 = vld [vmem:[%s3 + $0x48] sm:$0xff]
      %v498 = vld [vmem:[%s3 + $0x50] sm:$0xff]
      %v499 = vld [vmem:[%s3 + $0x58] sm:$0xff]
      %v500 = vld [vmem:[%s3 + $0x60] sm:$0xff]
      %v501 = vld [vmem:[%s3 + $0x68] sm:$0xff]
      %v502 = vld [vmem:[%s3 + $0x70] sm:$0xff]
      %v503 = vld [vmem:[%s3 + $0x78] sm:$0xff]
      %v504 = vld [vmem:[%s4] sm:$0x1]
      %v506 = vperm.slane %v504, 0
      %508 = vmatpush.msra.mxu0 %v503
      %509 = vmatpush.msra.mxu0 %v502
      %510 = vmatpush.msra.mxu0 %v501
      %511 = vmatpush.msra.mxu0 %v500
      %512 = vmatpush.msra.mxu0 %v499
      %513 = vmatpush.msra.mxu0 %v498
      %514 = vmatpush.msra.mxu0 %v497
      %515 = vmatpush.msra.mxu0 %v496
      %516 = vmatpush.msra.mxu0 %v495
      %517 = vmatpush.msra.mxu0 %v494
      %518 = vmatpush.msra.mxu0 %v493
      %519 = vmatpush.msra.mxu0 %v492
      %520 = vmatpush.msra.mxu0 %v491
      %521 = vmatpush.msra.mxu0 %v490
      %522 = vmatpush.msra.mxu0 %v489
      %523 = vmatpush.msra.mxu0 %v488
      %524 = vmatmul.f32.gmra.mxu0 %v472
      %v525 = vpop.f32.mrf.mxu0
      %v526 = vadd.f32 %v506, %v525
      %527 = vmatmul.f32.gmra.mxu0 %v473
      %v528 = vpop.f32.mrf.mxu0
      %v529 = vadd.f32 %v506, %v528
      %530 = vmatmul.f32.gmra.mxu0 %v474
      %v531 = vpop.f32.mrf.mxu0
      %v532 = vadd.f32 %v506, %v531
      %533 = vmatmul.f32.gmra.mxu0 %v475
      %v534 = vpop.f32.mrf.mxu0
      %v535 = vadd.f32 %v506, %v534
      %536 = vmatmul.f32.gmra.mxu0 %v476
      %v537 = vpop.f32.mrf.mxu0
      %v538 = vadd.f32 %v506, %v537
      %539 = vmatmul.f32.gmra.mxu0 %v477
      %v540 = vpop.f32.mrf.mxu0
      %v541 = vadd.f32 %v506, %v540
      %542 = vmatmul.f32.gmra.mxu0 %v478
      %v543 = vpop.f32.mrf.mxu0
      %v544 = vadd.f32 %v506, %v543
      %545 = vmatmul.f32.gmra.mxu0 %v479
      %v546 = vpop.f32.mrf.mxu0
      %v547 = vadd.f32 %v506, %v546
      %548 = vmatmul.f32.gmra.mxu0 %v480
      %v549 = vpop.f32.mrf.mxu0
      %v550 = vadd.f32 %v506, %v549
      %551 = vmatmul.f32.gmra.mxu0 %v481
      %v552 = vpop.f32.mrf.mxu0
      %v553 = vadd.f32 %v506, %v552
      %554 = vmatmul.f32.gmra.mxu0 %v482
      %v555 = vpop.f32.mrf.mxu0
      %v556 = vadd.f32 %v506, %v555
      %557 = vmatmul.f32.gmra.mxu0 %v483
      %v558 = vpop.f32.mrf.mxu0
      %v559 = vadd.f32 %v506, %v558
      %560 = vmatmul.f32.gmra.mxu0 %v484
      %v561 = vpop.f32.mrf.mxu0
      %v562 = vadd.f32 %v506, %v561
      %563 = vmatmul.f32.gmra.mxu0 %v485
      %v564 = vpop.f32.mrf.mxu0
      %v565 = vadd.f32 %v506, %v564
      %566 = vmatmul.f32.gmra.mxu0 %v486
      %v567 = vpop.f32.mrf.mxu0
      %v568 = vadd.f32 %v506, %v567
      %569 = vmatmul.f32.gmra.mxu0 %v487
      %v570 = vpop.f32.mrf.mxu0
      %v571 = vadd.f32 %v506, %v570
      %572 = vdwg.mxu0
      %v573 = vmax.f32 %v526, 0.0
      %v574 = vmax.f32 %v529, 0.0
      %v575 = vmax.f32 %v532, 0.0
      %v576 = vmax.f32 %v535, 0.0
      %v577 = vmax.f32 %v538, 0.0
      %v578 = vmax.f32 %v541, 0.0
      %v579 = vmax.f32 %v544, 0.0
      %v580 = vmax.f32 %v547, 0.0
      %v581 = vmax.f32 %v550, 0.0
      %v582 = vmax.f32 %v553, 0.0
      %v583 = vmax.f32 %v556, 0.0
      %v584 = vmax.f32 %v559, 0.0
      %v585 = vmax.f32 %v562, 0.0
      %v586 = vmax.f32 %v565, 0.0
      %v587 = vmax.f32 %v568, 0.0
      %v588 = vmax.f32 %v571, 0.0
      %v589 = vld [vmem:[%s5] sm:$0xff]
      %v590 = vld [vmem:[%s5 + $0x8] sm:$0xff]
      %v591 = vld [vmem:[%s5 + $0x10] sm:$0xff]
      %v592 = vld [vmem:[%s5 + $0x18] sm:$0xff]
      %v593 = vld [vmem:[%s5 + $0x20] sm:$0xff]
      %v594 = vld [vmem:[%s5 + $0x28] sm:$0xff]
      %v595 = vld [vmem:[%s5 + $0x30] sm:$0xff]
      %v596 = vld [vmem:[%s5 + $0x38] sm:$0xff]
      %v597 = vld [vmem:[%s5 + $0x40] sm:$0xff]
      %v598 = vld [vmem:[%s5 + $0x48] sm:$0xff]
      %v599 = vld [vmem:[%s5 + $0x50] sm:$0xff]
      %v600 = vld [vmem:[%s5 + $0x58] sm:$0xff]
      %v601 = vld [vmem:[%s5 + $0x60] sm:$0xff]
      %v602 = vld [vmem:[%s5 + $0x68] sm:$0xff]
      %v603 = vld [vmem:[%s5 + $0x70] sm:$0xff]
      %v604 = vld [vmem:[%s5 + $0x78] sm:$0xff]
      %v605 = vld [vmem:[%s6] sm:$0x1]
      %v607 = vperm.slane %v605, 0
      %609 = vmatpush.msra.mxu0 %v604
      %610 = vmatpush.msra.mxu0 %v603
      %611 = vmatpush.msra.mxu0 %v602
      %612 = vmatpush.msra.mxu0 %v601
      %613 = vmatpush.msra.mxu0 %v600
      %614 = vmatpush.msra.mxu0 %v599
      %615 = vmatpush.msra.mxu0 %v598
      %616 = vmatpush.msra.mxu0 %v597
      %617 = vmatpush.msra.mxu0 %v596
      %618 = vmatpush.msra.mxu0 %v595
      %619 = vmatpush.msra.mxu0 %v594
      %620 = vmatpush.msra.mxu0 %v593
      %621 = vmatpush.msra.mxu0 %v592
      %622 = vmatpush.msra.mxu0 %v591
      %623 = vmatpush.msra.mxu0 %v590
      %624 = vmatpush.msra.mxu0 %v589
      %625 = vmatmul.f32.gmra.mxu0 %v573
      %v626 = vpop.f32.mrf.mxu0
      %v627 = vadd.f32 %v607, %v626
      %628 = vmatmul.f32.gmra.mxu0 %v574
      %v629 = vpop.f32.mrf.mxu0
      %v630 = vadd.f32 %v607, %v629
      %631 = vmatmul.f32.gmra.mxu0 %v575
      %v632 = vpop.f32.mrf.mxu0
      %v633 = vadd.f32 %v607, %v632
      %634 = vmatmul.f32.gmra.mxu0 %v576
      %v635 = vpop.f32.mrf.mxu0
      %v636 = vadd.f32 %v607, %v635
      %637 = vmatmul.f32.gmra.mxu0 %v577
      %v638 = vpop.f32.mrf.mxu0
      %v639 = vadd.f32 %v607, %v638
      %640 = vmatmul.f32.gmra.mxu0 %v578
      %v641 = vpop.f32.mrf.mxu0
      %v642 = vadd.f32 %v607, %v641
      %643 = vmatmul.f32.gmra.mxu0 %v579
      %v644 = vpop.f32.mrf.mxu0
      %v645 = vadd.f32 %v607, %v644
      %646 = vmatmul.f32.gmra.mxu0 %v580
      %v647 = vpop.f32.mrf.mxu0
      %v648 = vadd.f32 %v607, %v647
      %649 = vmatmul.f32.gmra.mxu0 %v581
      %v650 = vpop.f32.mrf.mxu0
      %v651 = vadd.f32 %v607, %v650
      %652 = vmatmul.f32.gmra.mxu0 %v582
      %v653 = vpop.f32.mrf.mxu0
      %v654 = vadd.f32 %v607, %v653
      %655 = vmatmul.f32.gmra.mxu0 %v583
      %v656 = vpop.f32.mrf.mxu0
      %v657 = vadd.f32 %v607, %v656
      %658 = vmatmul.f32.gmra.mxu0 %v584
      %v659 = vpop.f32.mrf.mxu0
      %v660 = vadd.f32 %v607, %v659
      %661 = vmatmul.f32.gmra.mxu0 %v585
      %v662 = vpop.f32.mrf.mxu0
      %v663 = vadd.f32 %v607, %v662
      %664 = vmatmul.f32.gmra.mxu0 %v586
      %v665 = vpop.f32.mrf.mxu0
      %v666 = vadd.f32 %v607, %v665
      %667 = vmatmul.f32.gmra.mxu0 %v587
      %v668 = vpop.f32.mrf.mxu0
      %v669 = vadd.f32 %v607, %v668
      %670 = vmatmul.f32.gmra.mxu0 %v588
      %v671 = vpop.f32.mrf.mxu0
      %v672 = vadd.f32 %v607, %v671
      %673 = vdwg.mxu0
      %v674 = vmax.f32 %v627, 0.0
      %v675 = vmax.f32 %v630, 0.0
      %v676 = vmax.f32 %v633, 0.0
      %v677 = vmax.f32 %v636, 0.0
      %v678 = vmax.f32 %v639, 0.0
      %v679 = vmax.f32 %v642, 0.0
      %v680 = vmax.f32 %v645, 0.0
      %v681 = vmax.f32 %v648, 0.0
      %v682 = vmax.f32 %v651, 0.0
      %v683 = vmax.f32 %v654, 0.0
      %v684 = vmax.f32 %v657, 0.0
      %v685 = vmax.f32 %v660, 0.0
      %v686 = vmax.f32 %v663, 0.0
      %v687 = vmax.f32 %v666, 0.0
      %v688 = vmax.f32 %v669, 0.0
      %v689 = vmax.f32 %v672, 0.0
      %v690 = vld [vmem:[%s7] sm:$0xff]
      %v691 = vld [vmem:[%s7 + $0x8] sm:$0xff]
      %v692 = vld [vmem:[%s7 + $0x10] sm:$0xff]
      %v693 = vld [vmem:[%s7 + $0x18] sm:$0xff]
      %v694 = vld [vmem:[%s7 + $0x20] sm:$0xff]
      %v695 = vld [vmem:[%s7 + $0x28] sm:$0xff]
      %v696 = vld [vmem:[%s7 + $0x30] sm:$0xff]
      %v697 = vld [vmem:[%s7 + $0x38] sm:$0xff]
      %v698 = vld [vmem:[%s7 + $0x40] sm:$0xff]
      %v699 = vld [vmem:[%s7 + $0x48] sm:$0xff]
      %v700 = vld [vmem:[%s7 + $0x50] sm:$0xff]
      %v701 = vld [vmem:[%s7 + $0x58] sm:$0xff]
      %v702 = vld [vmem:[%s7 + $0x60] sm:$0xff]
      %v703 = vld [vmem:[%s7 + $0x68] sm:$0xff]
      %v704 = vld [vmem:[%s7 + $0x70] sm:$0xff]
      %v705 = vld [vmem:[%s7 + $0x78] sm:$0xff]
      %v706 = vld [vmem:[%s8] sm:$0x1]
      %v708 = vperm.slane %v706, 0
      %710 = vmatpush.msra.mxu0 %v705
      %711 = vmatpush.msra.mxu0 %v704
      %712 = vmatpush.msra.mxu0 %v703
      %713 = vmatpush.msra.mxu0 %v702
      %714 = vmatpush.msra.mxu0 %v701
      %715 = vmatpush.msra.mxu0 %v700
      %716 = vmatpush.msra.mxu0 %v699
      %717 = vmatpush.msra.mxu0 %v698
      %718 = vmatpush.msra.mxu0 %v697
      %719 = vmatpush.msra.mxu0 %v696
      %720 = vmatpush.msra.mxu0 %v695
      %721 = vmatpush.msra.mxu0 %v694
      %722 = vmatpush.msra.mxu0 %v693
      %723 = vmatpush.msra.mxu0 %v692
      %724 = vmatpush.msra.mxu0 %v691
      %725 = vmatpush.msra.mxu0 %v690
      %726 = vmatmul.f32.gmra.mxu0 %v674
      %v727 = vpop.f32.mrf.mxu0
      %v728 = vadd.f32 %v708, %v727
      %729 = vmatmul.f32.gmra.mxu0 %v675
      %v730 = vpop.f32.mrf.mxu0
      %v731 = vadd.f32 %v708, %v730
      %732 = vmatmul.f32.gmra.mxu0 %v676
      %v733 = vpop.f32.mrf.mxu0
      %v734 = vadd.f32 %v708, %v733
      %735 = vmatmul.f32.gmra.mxu0 %v677
      %v736 = vpop.f32.mrf.mxu0
      %v737 = vadd.f32 %v708, %v736
      %738 = vmatmul.f32.gmra.mxu0 %v678
      %v739 = vpop.f32.mrf.mxu0
      %v740 = vadd.f32 %v708, %v739
      %741 = vmatmul.f32.gmra.mxu0 %v679
      %v742 = vpop.f32.mrf.mxu0
      %v743 = vadd.f32 %v708, %v742
      %744 = vmatmul.f32.gmra.mxu0 %v680
      %v745 = vpop.f32.mrf.mxu0
      %v746 = vadd.f32 %v708, %v745
      %747 = vmatmul.f32.gmra.mxu0 %v681
      %v748 = vpop.f32.mrf.mxu0
      %v749 = vadd.f32 %v708, %v748
      %750 = vmatmul.f32.gmra.mxu0 %v682
      %v751 = vpop.f32.mrf.mxu0
      %v752 = vadd.f32 %v708, %v751
      %753 = vmatmul.f32.gmra.mxu0 %v683
      %v754 = vpop.f32.mrf.mxu0
      %v755 = vadd.f32 %v708, %v754
      %756 = vmatmul.f32.gmra.mxu0 %v684
      %v757 = vpop.f32.mrf.mxu0
      %v758 = vadd.f32 %v708, %v757
      %759 = vmatmul.f32.gmra.mxu0 %v685
      %v760 = vpop.f32.mrf.mxu0
      %v761 = vadd.f32 %v708, %v760
      %762 = vmatmul.f32.gmra.mxu0 %v686
      %v763 = vpop.f32.mrf.mxu0
      %v764 = vadd.f32 %v708, %v763
      %765 = vmatmul.f32.gmra.mxu0 %v687
      %v766 = vpop.f32.mrf.mxu0
      %v767 = vadd.f32 %v708, %v766
      %768 = vmatmul.f32.gmra.mxu0 %v688
      %v769 = vpop.f32.mrf.mxu0
      %v770 = vadd.f32 %v708, %v769
      %771 = vmatmul.f32.gmra.mxu0 %v689
      %v772 = vpop.f32.mrf.mxu0
      %v773 = vadd.f32 %v708, %v772
      %774 = vdwg.mxu0
      %vm775 = vcmask 31744
      %776 = vst.msk [vmem:[%s334] sm:$0xff] %vm775, %v728
      %777 = vst.msk [vmem:[%s334 + $0x8] sm:$0xff] %vm775, %v731
      %778 = vst.msk [vmem:[%s334 + $0x10] sm:$0xff] %vm775, %v734
      %779 = vst.msk [vmem:[%s334 + $0x18] sm:$0xff] %vm775, %v737
      %780 = vst.msk [vmem:[%s334 + $0x20] sm:$0xff] %vm775, %v740
      %781 = vst.msk [vmem:[%s334 + $0x28] sm:$0xff] %vm775, %v743
      %782 = vst.msk [vmem:[%s334 + $0x30] sm:$0xff] %vm775, %v746
      %783 = vst.msk [vmem:[%s334 + $0x38] sm:$0xff] %vm775, %v749
      %784 = vst.msk [vmem:[%s334 + $0x40] sm:$0xff] %vm775, %v752
      %785 = vst.msk [vmem:[%s334 + $0x48] sm:$0xff] %vm775, %v755
      %786 = vst.msk [vmem:[%s334 + $0x50] sm:$0xff] %vm775, %v758
      %787 = vst.msk [vmem:[%s334 + $0x58] sm:$0xff] %vm775, %v761
      %788 = vst.msk [vmem:[%s334 + $0x60] sm:$0xff] %vm775, %v764
      %789 = vst.msk [vmem:[%s334 + $0x68] sm:$0xff] %vm775, %v767
      %790 = vst.msk [vmem:[%s334 + $0x70] sm:$0xff] %vm775, %v770
      %791 = vst.msk [vmem:[%s334 + $0x78] sm:$0xff] %vm775, %v773
      %s792 = smul.u32 16, %s20
      %p793 = scmp.lt.s32.totalorder %s792, 31
      %s794 = scalar_select %p793, %s792, 31
      %s795 = smul.addr %s794, 8
      %s796 = scalar_lea.vmem %s9, %s795
      // Predicated region
      $region57: #{tpu_custom_call.1} parent=55 // pred_check
        %p797 = pneg %p232
      $region58: #{tpu_custom_call.1} parent=55 // pred_check_branch
        %799 = sbr.rel (%p797) target = $region60
      $region59: #{tpu_custom_call.1} parent=55 // pred_region
        %s800 = smul.u32 16, %s20
      $region60: #{tpu_custom_call.1} parent=55 // pred_fallthru
        _
    $region56: #{tpu_custom_call.1} parent=5 // pred_fallthru
      _
    %p801 = scmp.le.s32.totalorder 2, %s15
    // Predicated region
    $region61: #{tpu_custom_call.1} parent=5 // pred_check
      %p802 = pneg %p801
    $region62: #{tpu_custom_call.1} parent=5 // pred_check_branch
      %804 = sbr.rel (%p802) target = $region64
    $region63: #{tpu_custom_call.1} parent=5 // pred_region
      %s805 = ssub.s32 %s15, 2
      // Predicated region
      $region65: #{tpu_custom_call.1} parent=63 // pred_check
        %p806 = pneg %p238
      $region66: #{tpu_custom_call.1} parent=63 // pred_check_branch
        %808 = sbr.rel (%p806) target = $region68
      $region67: #{tpu_custom_call.1} parent=63 // pred_region
        %s809 = smul.u32 16, %s21
        %p810 = scmp.lt.s32.totalorder %s809, 31
        %s811 = scalar_select %p810, %s809, 31
        %s812 = smul.addr %s811, 8
        %s813 = scalar_lea.vmem %s9, %s812
      $region68: #{tpu_custom_call.1} parent=63 // pred_fallthru
        _
    $region64: #{tpu_custom_call.1} parent=5 // pred_fallthru
      _
  $region6: #{tpu_custom_call.1} parent=0 // loop_footer
    %s19 = sadd.s32 1, %s15
  $region7: #{tpu_custom_call.1} parent=0 // loop_footer_branch
    %14 = sbr.rel target = $region3
  $region8: #{tpu_custom_call.1} parent=0 // loop_exit
    _

</llo_original>
